<compile_context>
chip_gen: v6e
topology: v6e:2x2x1
jax: 0.10.0
libtpu: 0.0.40
codegen_flags: <defaults>
</compile_context>

<pallas_src>
import functools
import math

import jax
import jax.numpy as jnp
from jax import lax
from jax.experimental import pallas as pl
from jax.experimental.pallas import tpu as pltpu

LEAKY_SLOPE = 0.2
EPS = 1e-8
KSIZE = 3


def mod_conv_kernel(x_ref, noise_ref, s_ref, demod_ref, wconv_ref, bias_ref,
                    mask_ref, scale_ref, out_ref, *, bpb, shifts, compute_dtype):
    ci = x_ref.shape[1]
    hw = x_ref.shape[2]

    scale_n = scale_ref[0, 0]            # scalar noise gain (SMEM)
    w_all = wconv_ref[...]               # [Co, 9*Ci] constant weight, (M, K)
    bias = bias_ref[...]                 # [Co, 1]

    # --- 9 shifted + boundary-masked views, built ONCE for the stacked
    # [bpb*Ci, HW] slab (lane rolls never mix rows, so sub-batches stay apart).
    xall = x_ref[...].reshape(bpb * ci, hw)
    views = []
    for t, shift in enumerate(shifts):
        if shift == 0:
            v = xall
        else:
            v = pltpu.roll(xall, shift=(-shift) % hw, axis=1)
            v = v * mask_ref[t:t + 1, :]          # fp32 {0,1} multiplicand
        views.append(v)

    for j in range(bpb):                          # static unroll, bpb in {1, 2}
        dcol = demod_ref[j]                       # [Ci, 1] demod (per in-channel)
        scol = s_ref[j]                           # [Co, 1] style (per out-channel)
        # Tap-major [9*Ci, HW] MXU RHS: per-tap slices scaled by the demod
        # column in fp32, cast to the bf16 fast path, then packed.
        pieces = [(v[j * ci:(j + 1) * ci, :] * dcol).astype(compute_dtype)
                  for v in views]
        x9 = jnp.concatenate(pieces, axis=0)                       # [9*Ci, HW]
        wm = (w_all * scol).astype(compute_dtype)                  # [Co, 9*Ci]

        acc = lax.dot_general(wm, x9, (((1,), (0,)), ((), ())),
                              preferred_element_type=jnp.float32)  # [Co, HW]

        acc = acc + scale_n * noise_ref[j]        # [1, HW] broadcast, fp32
        acc = acc + bias                          # [Co, 1] broadcast, fp32
        out_ref[j] = jnp.where(acc >= 0, acc, LEAKY_SLOPE * acc).astype(out_ref.dtype)


def style_block_forward(x, w, noise, params, *, compute_dtype=jnp.bfloat16):
    B, C, H, Wsp = x.shape
    HW = H * Wsp

    wlin = params["w_lin"].astype(jnp.float32)                # [D, D]
    blin = params["b_lin"].astype(jnp.float32)                # [D]
    wconv = params["w_conv"].astype(jnp.float32)              # [Ci, Co, 3, 3]
    bias = params["bias"].astype(jnp.float32)                 # [Co]
    scale_noise = params["scale_noise"].astype(jnp.float32)   # [1]

    Ci, Co = wconv.shape[0], wconv.shape[1]

    # ---- XLA prologue: fold EqualizedWeights constants, style linear, demod.
    c_lin = 1.0 / math.sqrt(wlin.shape[1])
    c_conv = 1.0 / math.sqrt(Co * KSIZE * KSIZE)
    s = jnp.dot(w.astype(jnp.float32), (wlin * c_lin).T,
                precision=lax.Precision.HIGHEST) + blin                 # [B, Co]
    wc = wconv * c_conv                                                 # [Ci, Co, 3, 3]
    wsq = jnp.sum(wc * wc, axis=(2, 3))                                 # [Ci, Co]
    # demod keeps the IN channel (matches the module's [in, out, k, k] layout).
    demod = lax.rsqrt(jnp.dot(s * s, wsq.T,
                              precision=lax.Precision.HIGHEST) + EPS)   # [B, Ci]

    # Canonical MXU weight orientation: [Co, K] with K ordered (tap-major, Ci).
    wconv2 = jnp.transpose(wc, (1, 2, 3, 0)).reshape(Co, KSIZE * KSIZE * Ci)

    # Per-batch column vectors (trailing block dims == full dims -> always legal).
    s_col = s.reshape(B, Co, 1)
    demod_col = demod.reshape(B, Ci, 1)

    # Precomputed boundary masks [9, HW] and flat shift amounts for the 9 taps.
    xs = jnp.arange(HW, dtype=jnp.int32) % Wsp
    ys = jnp.arange(HW, dtype=jnp.int32) // Wsp
    masks, shifts = [], []
    for kh in range(KSIZE):
        for kw in range(KSIZE):
            dy, dx = kh - 1, kw - 1
            shifts.append(dy * Wsp + dx)
            valid = ((xs + dx >= 0) & (xs + dx < Wsp) &
                     (ys + dy >= 0) & (ys + dy < H))
            masks.append(valid)
    masks = jnp.stack(masks).astype(jnp.float32)                        # [9, HW]
    shifts = tuple(shifts)

    x_flat = x.astype(jnp.float32).reshape(B, Ci, HW)
    noise_flat = noise.astype(jnp.float32).reshape(B, 1, HW)
    bias_col = bias.reshape(Co, 1)
    scale_2d = scale_noise.reshape(1, 1)

    # bpb=1 keeps grid=(B,) so v7x megacore can shard small batches across both
    # TensorCores; bpb=2 amortizes per-step overhead on 1-TC chips at larger B.
    bpb = 2 if (B >= 4 and B % 2 == 0) else 1
    grid = (B // bpb,)

    kernel = functools.partial(mod_conv_kernel, bpb=bpb, shifts=shifts,
                               compute_dtype=compute_dtype)

    flops = 2 * B * Co * KSIZE * KSIZE * Ci * HW + 4 * B * KSIZE * KSIZE * Ci * HW
    bytes_accessed = 4 * (x_flat.size + noise_flat.size + B * Co * HW
                          + wconv2.size + masks.size + s_col.size + demod_col.size)

    out_flat = pl.pallas_call(
        kernel,
        out_shape=jax.ShapeDtypeStruct((B, Co, HW), jnp.float32),
        grid=grid,
        in_specs=[
            pl.BlockSpec((bpb, Ci, HW), lambda g: (g, 0, 0)),       # x
            pl.BlockSpec((bpb, 1, HW), lambda g: (g, 0, 0)),        # noise
            pl.BlockSpec((bpb, Co, 1), lambda g: (g, 0, 0)),        # style columns
            pl.BlockSpec((bpb, Ci, 1), lambda g: (g, 0, 0)),        # demod columns
            pl.BlockSpec((Co, KSIZE * KSIZE * Ci), lambda g: (0, 0)),  # conv weight
            pl.BlockSpec((Co, 1), lambda g: (0, 0)),                # output bias
            pl.BlockSpec((KSIZE * KSIZE, HW), lambda g: (0, 0)),    # boundary masks
            pl.BlockSpec(memory_space=pltpu.MemorySpace.SMEM),      # noise gain
        ],
        out_specs=pl.BlockSpec((bpb, Co, HW), lambda g: (g, 0, 0)),
        compiler_params=pltpu.CompilerParams(
            dimension_semantics=("parallel",),
            # TODO(synk): re-derive per chip at realistic sizes (64 MiB on v7x,
            # raise toward ~96 MiB on v6e); 32 MiB >> the toy working set and is
            # above v5e's 16 MiB scoped default.
            vmem_limit_bytes=32 * 1024 * 1024),
        cost_estimate=pl.CostEstimate(flops=flops, transcendentals=0,
                                      bytes_accessed=bytes_accessed),
    )(x_flat, noise_flat, s_col, demod_col, wconv2, bias_col, masks, scale_2d)

    return out_flat.reshape(B, Co, H, Wsp)


def reference_forward(x, w, noise, params):
    """Pure-JAX reference (XLA conv path) for validation."""
    wlin = params["w_lin"]
    blin = params["b_lin"]
    wconv = params["w_conv"]
    bias = params["bias"]
    scale_noise = params["scale_noise"]
    Ci, Co = wconv.shape[0], wconv.shape[1]
    c_lin = 1.0 / math.sqrt(wlin.shape[1])
    c_conv = 1.0 / math.sqrt(Co * KSIZE * KSIZE)

    s = jnp.dot(w, (wlin * c_lin).T, precision=lax.Precision.HIGHEST) + blin
    Wmod = (wconv * c_conv)[None] * s[:, None, :, None, None]        # [B,Ci,Co,3,3]
    demod = lax.rsqrt(jnp.sum(Wmod ** 2, axis=(2, 3, 4), keepdims=True) + EPS)
    Wmod = Wmod * demod

    def one(xb, Wb):
        Wt = jnp.transpose(Wb, (1, 0, 2, 3))                          # [Co,Ci,3,3]
        y = lax.conv_general_dilated(
            xb[None], Wt, (1, 1), "SAME",
            dimension_numbers=("NCHW", "OIHW", "NCHW"),
            precision=lax.Precision.HIGHEST)
        return y[0]

    y = jax.vmap(one)(x, Wmod)
    y = y + scale_noise[None, :, None, None] * noise
    y = y + bias[None, :, None, None]
    return jnp.where(y >= 0, y, LEAKY_SLOPE * y)


if __name__ == "__main__":
    # d_model == in_features == out_features is required for the module's
    # broadcasting to line up, so D = C = 4.
    B, C, H, Wsp = 2, 4, 16, 16
    D = C

    key = jax.random.PRNGKey(0)
    ks = jax.random.split(key, 7)
    params = {
        "w_lin": jax.random.normal(ks[0], (D, D), jnp.float32),
        "b_lin": jnp.zeros((D,), jnp.float32),
        "w_conv": jax.random.normal(ks[1], (C, C, KSIZE, KSIZE), jnp.float32),
        "bias": jax.random.normal(ks[2], (D,), jnp.float32),
        "scale_noise": jax.random.normal(ks[3], (1,), jnp.float32),
    }
    x = jax.random.normal(ks[4], (B, C, H, Wsp), jnp.float32)
    w = jax.random.normal(ks[5], (B, D), jnp.float32)
    noise = jax.random.normal(ks[6], (B, 1, H, Wsp), jnp.float32)

    # Fast path (bf16 MXU operands, fp32 accumulation) + fp32 path for tight check.
    out_bf16 = jax.block_until_ready(
        style_block_forward(x, w, noise, params, compute_dtype=jnp.bfloat16))
    out_f32 = jax.block_until_ready(
        style_block_forward(x, w, noise, params, compute_dtype=jnp.float32))

    ref = reference_forward(x, w, noise, params)
    assert out_bf16.shape == (B, C, H, Wsp), out_bf16.shape
    assert out_f32.shape == (B, C, H, Wsp), out_f32.shape

    err_f32 = float(jnp.max(jnp.abs(out_f32 - ref)))
    err_bf16 = float(jnp.max(jnp.abs(out_bf16 - ref)))
    assert jnp.allclose(out_f32, ref, atol=1e-3, rtol=1e-3), f"fp32 max_err={err_f32}"
    # bf16 operands carry ~2^-8 relative rounding, so the fast path is validated
    # at a correspondingly looser tolerance.
    assert jnp.allclose(out_bf16, ref, atol=5e-2, rtol=5e-2), f"bf16 max_err={err_bf16}"

    print("KERNEL_OK")
</pallas_src>

<mosaic_0001>
module attributes {stable_mosaic.version = 11 : i64} {
  func.func @mod_conv_kernel(%arg0: i32, %arg1: memref<1x4x256xf32, #tpu.memory_space<vmem>>, %arg2: memref<1x1x256xf32, #tpu.memory_space<vmem>>, %arg3: memref<1x4x1xf32, #tpu.memory_space<vmem>>, %arg4: memref<1x4x1xf32, #tpu.memory_space<vmem>>, %arg5: memref<4x36xf32, #tpu.memory_space<vmem>>, %arg6: memref<4x1xf32, #tpu.memory_space<vmem>>, %arg7: memref<9x256xf32, #tpu.memory_space<vmem>>, %arg8: memref<1x1xf32, #tpu.memory_space<smem>>, %arg9: memref<1x4x256xf32, #tpu.memory_space<vmem>>) attributes {dimension_semantics = [#tpu.dimension_semantics<parallel>], iteration_bounds = array<i64: 2>, scalar_prefetch = 0 : i64, scratch_operands = 0 : i64, tpu.core_type = #tpu.core_type<tc>, window_params = [{transform_indices = @transform_0, window_bounds = array<i64: 1, 4, 256>}, {transform_indices = @transform_1, window_bounds = array<i64: 1, 1, 256>}, {transform_indices = @transform_2, window_bounds = array<i64: 1, 4, 1>}, {transform_indices = @transform_3, window_bounds = array<i64: 1, 4, 1>}, {pipeline_mode = #tpu.pipeline_mode<synchronous>, transform_indices = @transform_4, window_bounds = array<i64: 4, 36>}, {pipeline_mode = #tpu.pipeline_mode<synchronous>, transform_indices = @transform_5, window_bounds = array<i64: 4, 1>}, {pipeline_mode = #tpu.pipeline_mode<synchronous>, transform_indices = @transform_6, window_bounds = array<i64: 9, 256>}, {transform_indices = @transform_7, window_bounds = array<i64: 1, 1>}, {transform_indices = @transform_8, window_bounds = array<i64: 1, 4, 256>}]} {
    %c0 = arith.constant 0 : index
    %c0_0 = arith.constant 0 : index
    %0 = memref.load %arg8[%c0, %c0_0] : memref<1x1xf32, #tpu.memory_space<smem>>
    %c0_1 = arith.constant 0 : index
    %c0_2 = arith.constant 0 : index
    %1 = vector.load %arg5[%c0_1, %c0_2] : memref<4x36xf32, #tpu.memory_space<vmem>>, vector<4x36xf32>
    %c0_3 = arith.constant 0 : index
    %c0_4 = arith.constant 0 : index
    %2 = vector.load %arg6[%c0_3, %c0_4] : memref<4x1xf32, #tpu.memory_space<vmem>>, vector<4x1xf32>
    %c0_5 = arith.constant 0 : index
    %c0_6 = arith.constant 0 : index
    %c0_7 = arith.constant 0 : index
    %3 = vector.load %arg1[%c0_5, %c0_6, %c0_7] : memref<1x4x256xf32, #tpu.memory_space<vmem>>, vector<1x4x256xf32>
    %4 = vector.shape_cast %3 : vector<1x4x256xf32> to vector<4x256xf32>
    %c17_i32 = arith.constant 17 : i32
    %5 = tpu.dynamic_rotate %4 by %c17_i32 dim 1 : vector<4x256xf32>, i32 -> vector<4x256xf32>
    %c0_8 = arith.constant 0 : index
    %c0_9 = arith.constant 0 : index
    %6 = vector.load %arg7[%c0_8, %c0_9] : memref<9x256xf32, #tpu.memory_space<vmem>>, vector<1x256xf32>
    %7 = vector.broadcast %6 : vector<1x256xf32> to vector<4x256xf32>
    %8 = arith.mulf %5, %7 : vector<4x256xf32>
    %c16_i32 = arith.constant 16 : i32
    %9 = tpu.dynamic_rotate %4 by %c16_i32 dim 1 : vector<4x256xf32>, i32 -> vector<4x256xf32>
    %c1 = arith.constant 1 : index
    %c0_10 = arith.constant 0 : index
    %10 = vector.load %arg7[%c1, %c0_10] : memref<9x256xf32, #tpu.memory_space<vmem>>, vector<1x256xf32>
    %11 = vector.broadcast %10 : vector<1x256xf32> to vector<4x256xf32>
    %12 = arith.mulf %9, %11 : vector<4x256xf32>
    %c15_i32 = arith.constant 15 : i32
    %13 = tpu.dynamic_rotate %4 by %c15_i32 dim 1 : vector<4x256xf32>, i32 -> vector<4x256xf32>
    %c2 = arith.constant 2 : index
    %c0_11 = arith.constant 0 : index
    %14 = vector.load %arg7[%c2, %c0_11] : memref<9x256xf32, #tpu.memory_space<vmem>>, vector<1x256xf32>
    %15 = vector.broadcast %14 : vector<1x256xf32> to vector<4x256xf32>
    %16 = arith.mulf %13, %15 : vector<4x256xf32>
    %c1_i32 = arith.constant 1 : i32
    %17 = tpu.dynamic_rotate %4 by %c1_i32 dim 1 : vector<4x256xf32>, i32 -> vector<4x256xf32>
    %c3 = arith.constant 3 : index
    %c0_12 = arith.constant 0 : index
    %18 = vector.load %arg7[%c3, %c0_12] : memref<9x256xf32, #tpu.memory_space<vmem>>, vector<1x256xf32>
    %19 = vector.broadcast %18 : vector<1x256xf32> to vector<4x256xf32>
    %20 = arith.mulf %17, %19 : vector<4x256xf32>
    %c255_i32 = arith.constant 255 : i32
    %21 = tpu.dynamic_rotate %4 by %c255_i32 dim 1 : vector<4x256xf32>, i32 -> vector<4x256xf32>
    %c5 = arith.constant 5 : index
    %c0_13 = arith.constant 0 : index
    %22 = vector.load %arg7[%c5, %c0_13] : memref<9x256xf32, #tpu.memory_space<vmem>>, vector<1x256xf32>
    %23 = vector.broadcast %22 : vector<1x256xf32> to vector<4x256xf32>
    %24 = arith.mulf %21, %23 : vector<4x256xf32>
    %c241_i32 = arith.constant 241 : i32
    %25 = tpu.dynamic_rotate %4 by %c241_i32 dim 1 : vector<4x256xf32>, i32 -> vector<4x256xf32>
    %c6 = arith.constant 6 : index
    %c0_14 = arith.constant 0 : index
    %26 = vector.load %arg7[%c6, %c0_14] : memref<9x256xf32, #tpu.memory_space<vmem>>, vector<1x256xf32>
    %27 = vector.broadcast %26 : vector<1x256xf32> to vector<4x256xf32>
    %28 = arith.mulf %25, %27 : vector<4x256xf32>
    %c240_i32 = arith.constant 240 : i32
    %29 = tpu.dynamic_rotate %4 by %c240_i32 dim 1 : vector<4x256xf32>, i32 -> vector<4x256xf32>
    %c7 = arith.constant 7 : index
    %c0_15 = arith.constant 0 : index
    %30 = vector.load %arg7[%c7, %c0_15] : memref<9x256xf32, #tpu.memory_space<vmem>>, vector<1x256xf32>
    %31 = vector.broadcast %30 : vector<1x256xf32> to vector<4x256xf32>
    %32 = arith.mulf %29, %31 : vector<4x256xf32>
    %c239_i32 = arith.constant 239 : i32
    %33 = tpu.dynamic_rotate %4 by %c239_i32 dim 1 : vector<4x256xf32>, i32 -> vector<4x256xf32>
    %c8 = arith.constant 8 : index
    %c0_16 = arith.constant 0 : index
    %34 = vector.load %arg7[%c8, %c0_16] : memref<9x256xf32, #tpu.memory_space<vmem>>, vector<1x256xf32>
    %35 = vector.broadcast %34 : vector<1x256xf32> to vector<4x256xf32>
    %36 = arith.mulf %33, %35 : vector<4x256xf32>
    %c0_17 = arith.constant 0 : index
    %c0_18 = arith.constant 0 : index
    %c0_19 = arith.constant 0 : index
    %37 = vector.load %arg4[%c0_17, %c0_18, %c0_19] : memref<1x4x1xf32, #tpu.memory_space<vmem>>, vector<1x4x1xf32>
    %38 = vector.shape_cast %37 : vector<1x4x1xf32> to vector<4x1xf32>
    %c0_20 = arith.constant 0 : index
    %c0_21 = arith.constant 0 : index
    %c0_22 = arith.constant 0 : index
    %39 = vector.load %arg3[%c0_20, %c0_21, %c0_22] : memref<1x4x1xf32, #tpu.memory_space<vmem>>, vector<1x4x1xf32>
    %40 = vector.shape_cast %39 : vector<1x4x1xf32> to vector<4x1xf32>
    %41 = vector.broadcast %38 : vector<4x1xf32> to vector<4x256xf32>
    %42 = arith.mulf %8, %41 : vector<4x256xf32>
    %43 = arith.truncf %42 : vector<4x256xf32> to vector<4x256xbf16>
    %44 = vector.broadcast %38 : vector<4x1xf32> to vector<4x256xf32>
    %45 = arith.mulf %12, %44 : vector<4x256xf32>
    %46 = arith.truncf %45 : vector<4x256xf32> to vector<4x256xbf16>
    %47 = vector.broadcast %38 : vector<4x1xf32> to vector<4x256xf32>
    %48 = arith.mulf %16, %47 : vector<4x256xf32>
    %49 = arith.truncf %48 : vector<4x256xf32> to vector<4x256xbf16>
    %50 = vector.broadcast %38 : vector<4x1xf32> to vector<4x256xf32>
    %51 = arith.mulf %20, %50 : vector<4x256xf32>
    %52 = arith.truncf %51 : vector<4x256xf32> to vector<4x256xbf16>
    %53 = vector.broadcast %38 : vector<4x1xf32> to vector<4x256xf32>
    %54 = arith.mulf %4, %53 : vector<4x256xf32>
    %55 = arith.truncf %54 : vector<4x256xf32> to vector<4x256xbf16>
    %56 = vector.broadcast %38 : vector<4x1xf32> to vector<4x256xf32>
    %57 = arith.mulf %24, %56 : vector<4x256xf32>
    %58 = arith.truncf %57 : vector<4x256xf32> to vector<4x256xbf16>
    %59 = vector.broadcast %38 : vector<4x1xf32> to vector<4x256xf32>
    %60 = arith.mulf %28, %59 : vector<4x256xf32>
    %61 = arith.truncf %60 : vector<4x256xf32> to vector<4x256xbf16>
    %62 = vector.broadcast %38 : vector<4x1xf32> to vector<4x256xf32>
    %63 = arith.mulf %32, %62 : vector<4x256xf32>
    %64 = arith.truncf %63 : vector<4x256xf32> to vector<4x256xbf16>
    %65 = vector.broadcast %38 : vector<4x1xf32> to vector<4x256xf32>
    %66 = arith.mulf %36, %65 : vector<4x256xf32>
    %67 = arith.truncf %66 : vector<4x256xf32> to vector<4x256xbf16>
    %68 = tpu.concatenate %43, %46, %49, %52, %55, %58, %61, %64, %67 in 0 : vector<4x256xbf16>, vector<4x256xbf16>, vector<4x256xbf16>, vector<4x256xbf16>, vector<4x256xbf16>, vector<4x256xbf16>, vector<4x256xbf16>, vector<4x256xbf16>, vector<4x256xbf16> -> vector<36x256xbf16>
    %69 = vector.broadcast %40 : vector<4x1xf32> to vector<4x36xf32>
    %70 = arith.mulf %1, %69 : vector<4x36xf32>
    %71 = arith.truncf %70 : vector<4x36xf32> to vector<4x36xbf16>
    %cst = arith.constant dense<0.000000e+00> : vector<4x256xf32>
    %72 = tpu.matmul %71, %68, %cst {dimension_numbers = #tpu.dot_dimension_numbers<[1], [0], [0], [1], [0, 0, 1, 1], [], []>} : vector<4x36xbf16>, vector<36x256xbf16>, vector<4x256xf32> -> vector<4x256xf32>
    %c0_23 = arith.constant 0 : index
    %c0_24 = arith.constant 0 : index
    %c0_25 = arith.constant 0 : index
    %73 = vector.load %arg2[%c0_23, %c0_24, %c0_25] : memref<1x1x256xf32, #tpu.memory_space<vmem>>, vector<1x1x256xf32>
    %74 = vector.shape_cast %73 : vector<1x1x256xf32> to vector<1x256xf32>
    %75 = vector.broadcast %0 : f32 to vector<1x256xf32>
    %76 = arith.mulf %75, %74 : vector<1x256xf32>
    %77 = vector.broadcast %76 : vector<1x256xf32> to vector<4x256xf32>
    %78 = arith.addf %72, %77 : vector<4x256xf32>
    %79 = vector.broadcast %2 : vector<4x1xf32> to vector<4x256xf32>
    %80 = arith.addf %78, %79 : vector<4x256xf32>
    %cst_26 = arith.constant 0.000000e+00 : f32
    %81 = vector.broadcast %cst_26 : f32 to vector<4x256xf32>
    %82 = arith.cmpf oge, %80, %81 : vector<4x256xf32>
    %cst_27 = arith.constant 2.000000e-01 : f32
    %83 = vector.broadcast %cst_27 : f32 to vector<4x256xf32>
    %84 = arith.mulf %83, %80 : vector<4x256xf32>
    %85 = arith.select %82, %80, %84 : vector<4x256xi1>, vector<4x256xf32>
    %c0_28 = arith.constant 0 : index
    %c0_29 = arith.constant 0 : index
    %c0_30 = arith.constant 0 : index
    %86 = vector.load %arg9[%c0_28, %c0_29, %c0_30] : memref<1x4x256xf32, #tpu.memory_space<vmem>>, vector<1x4x256xf32>
    %87 = vector.shape_cast %86 : vector<1x4x256xf32> to vector<4x256xf32>
    %88 = vector.shape_cast %85 : vector<4x256xf32> to vector<1x4x256xf32>
    tpu.vector_store %arg9[%c0_28, %c0_29, %c0_30], %88 {strides = array<i32>} : memref<1x4x256xf32, #tpu.memory_space<vmem>>, vector<1x4x256xf32>,
    return
  }
  func.func @transform_0(%arg0: i32) -> (i32, i32, i32) {
    %c0_i32 = arith.constant 0 : i32
    %c0_i32_0 = arith.constant 0 : i32
    %c0_i32_1 = arith.constant 0 : i32
    return %arg0, %c0_i32, %c0_i32_0 : i32, i32, i32
  }
  func.func @transform_1(%arg0: i32) -> (i32, i32, i32) {
    %c0_i32 = arith.constant 0 : i32
    %c0_i32_0 = arith.constant 0 : i32
    %c0_i32_1 = arith.constant 0 : i32
    return %arg0, %c0_i32, %c0_i32_0 : i32, i32, i32
  }
  func.func @transform_2(%arg0: i32) -> (i32, i32, i32) {
    %c0_i32 = arith.constant 0 : i32
    %c0_i32_0 = arith.constant 0 : i32
    %c0_i32_1 = arith.constant 0 : i32
    return %arg0, %c0_i32, %c0_i32_0 : i32, i32, i32
  }
  func.func @transform_3(%arg0: i32) -> (i32, i32, i32) {
    %c0_i32 = arith.constant 0 : i32
    %c0_i32_0 = arith.constant 0 : i32
    %c0_i32_1 = arith.constant 0 : i32
    return %arg0, %c0_i32, %c0_i32_0 : i32, i32, i32
  }
  func.func @transform_4(%arg0: i32) -> (i32, i32) {
    %c0_i32 = arith.constant 0 : i32
    %c0_i32_0 = arith.constant 0 : i32
    %c0_i32_1 = arith.constant 0 : i32
    return %c0_i32, %c0_i32_0 : i32, i32
  }
  func.func @transform_5(%arg0: i32) -> (i32, i32) {
    %c0_i32 = arith.constant 0 : i32
    %c0_i32_0 = arith.constant 0 : i32
    %c0_i32_1 = arith.constant 0 : i32
    return %c0_i32, %c0_i32_0 : i32, i32
  }
  func.func @transform_6(%arg0: i32) -> (i32, i32) {
    %c0_i32 = arith.constant 0 : i32
    %c0_i32_0 = arith.constant 0 : i32
    %c0_i32_1 = arith.constant 0 : i32
    return %c0_i32, %c0_i32_0 : i32, i32
  }
  func.func @transform_7(%arg0: i32) -> (i32, i32) {
    %c0_i32 = arith.constant 0 : i32
    %c0_i32_0 = arith.constant 0 : i32
    %c0_i32_1 = arith.constant 0 : i32
    return %c0_i32, %c0_i32_0 : i32, i32
  }
  func.func @transform_8(%arg0: i32) -> (i32, i32, i32) {
    %c0_i32 = arith.constant 0 : i32
    %c0_i32_0 = arith.constant 0 : i32
    %c0_i32_1 = arith.constant 0 : i32
    return %arg0, %c0_i32, %c0_i32_0 : i32, i32, i32
  }
}

</mosaic_0001>

<llo_original>
// kernel: tpu_custom_call.1
$region0: #{tpu_custom_call.1}
  #allocation0 [shape = 'u32[]', space=smem, size = 0x4, offset = 0x4, fixed_abs, tag = 'smem constant byte address 0x4 - core index']
  #allocation1 [shape = 'u32[144,128]{1,0:T(1,128)}', space=vmem, size = 0x12000, scoped, tag = 'internal scratch']
  #allocation2 [shape = 'f32[1,1]{1,0:T(1,128)S(6)}', space=smem, size = 0x200, scoped, tag = 'scoped memory for tpu_custom_call.1']
  %s0 = inlined_call_operand.hbm [shape: f32[2,4,256], index: 0, kind: input, shape index: {}]
  %s1 = inlined_call_operand.vmem [shape: f32[2,1,256], index: 1, kind: input, shape index: {}]
  %s2 = inlined_call_operand.vmem [shape: f32[2,4,1], index: 2, kind: input, shape index: {}]
  %s3 = inlined_call_operand.vmem [shape: f32[2,4,1], index: 3, kind: input, shape index: {}]
  %s4 = inlined_call_operand.hbm [shape: f32[4,36], index: 4, kind: input, shape index: {}]
  %s5 = inlined_call_operand.vmem [shape: f32[4,1], index: 5, kind: input, shape index: {}]
  %s6 = inlined_call_operand.vmem [shape: f32[9,256], index: 6, kind: input, shape index: {}]
  %s7 = inlined_call_operand.<no memory space> [shape: f32[1,1], index: 7, kind: input, shape index: {}]
  %s8 = inlined_call_operand.hbm [shape: f32[2,4,256], index: 8, kind: output, shape index: {}]
  %s9 = sld [smem:[#allocation0]]
  $region73: #{tpu_custom_call.1} parent=0
    _
  %s11 = ssub.s32 1, %s9
  %s12 = scalar_select 0, %s11, %s9
  %13 = sst [smem:[#allocation2]] %s7
  $region1: #{tpu_custom_call.1} parent=0
    #allocation3 [shape = 'u8[8192]{0}', space=vmem, size = 0x2000, scoped, tag = 'input window, operand 0']
    #allocation4 [shape = 's32[2]{0}', space=sflag, size = 0x8, scoped, tag = 'scoped memory for tpu_custom_call.1']
    #allocation5 [shape = 's32[2]{0}', space=sflag, size = 0x8, scoped, tag = 'scoped memory for tpu_custom_call.1']
    #allocation6 [shape = 'u8[2048]{0}', space=vmem, size = 0x800, scoped, tag = 'input window, operand 4, single buffered']
    #allocation7 [shape = 's32[1]{0}', space=sflag, size = 0x4, scoped, tag = 'scoped memory for tpu_custom_call.1']
    #allocation8 [shape = 'u8[8192]{0}', space=vmem, size = 0x2000, scoped, tag = 'output window, operand 0']
    %14 = vsyncpa [#allocation4], 0
    %s15 = scalar_lea.sflag [#allocation4], 1
    %16 = vsyncpa %s15, 0
    %17 = vsyncpa [#allocation7], 0
    %18 = vsyncpa [#allocation5], 0
    %s19 = scalar_lea.sflag [#allocation5], 1
    %20 = vsyncpa %s19, 0
    loop: start=0, step=1, limit=4
    $region2: #{tpu_custom_call.1} parent=1 // loop_pre_header
      _
    $region3: #{tpu_custom_call.1} parent=1 // loop_header
      %s22 = sphi 0, %s26
      %p23 = scmp.ge.s32.totalorder %s22, 4
      %s32 = sphi 0, %s34
      %s35 = sphi 0, %s32
      %s36 = sphi 0, %s35
      %s52 = sphi 0, %s36
      %s58 = sphi 0, %s60
      %s61 = sphi 0, %s58
      %s62 = sphi 0, %s61
      %s78 = sphi 0, %s62
      %s84 = sphi 0, %s86
      %s87 = sphi 0, %s84
      %s88 = sphi 0, %s87
      %s104 = sphi 0, %s88
      %s110 = sphi 0, %s112
      %s113 = sphi 0, %s110
      %s114 = sphi 0, %s113
      %s130 = sphi 0, %s114
      %s134 = sphi 0, %s134
      %s136 = sphi 0, %s134
      %s137 = sphi 0, %s136
      %s151 = sphi 0, %s137
      %s155 = sphi 0, %s155
      %s157 = sphi 0, %s155
      %s158 = sphi 0, %s157
      %s172 = sphi 0, %s158
      %s176 = sphi 0, %s176
      %s178 = sphi 0, %s176
      %s179 = sphi 0, %s178
      %s193 = sphi 0, %s179
      %s197 = sphi 0, %s197
      %s199 = sphi 0, %s197
      %s200 = sphi 0, %s199
      %s214 = sphi 0, %s200
      %s220 = sphi 0, %s222
      %s223 = sphi 0, %s220
      %s224 = sphi 0, %s223
      %s240 = sphi 0, %s224
    $region4: #{tpu_custom_call.1} parent=1 // loop_header_branch
      %25 = sbr.rel (%p23) target = $region8
    $region5: #{tpu_custom_call.1} parent=1 // loop_body
      %s27 = ssub.s32 %s22, 1
      %s28 = ssub.s32 %s22, 2
      %s29 = sadd.s32 %s22, 1
      %s30 = ssub.s32 %s22, %s29
      %p31 = scmp.eq.s32.totalorder %s30, 0
      %s33 = sadd.s32 %s32, 1
      %s34 = scalar_select %p31, %s32, %s33
      %p37 = pneg %p31
      %p38 = scmp.eq.s32.totalorder %s22, 1
      %p39 = por %p37, %p38
      %p40 = scmp.ne.s32.totalorder %s32, %s35
      %p41 = scmp.eq.s32.totalorder %s22, 0
      %p42 = por %p40, %p41
      %p43 = scmp.ne.s32.totalorder %s32, %s35
      %p44 = scmp.eq.s32.totalorder %s27, 1
      %p45 = por %p43, %p44
      %p46 = scmp.ne.s32.totalorder %s35, %s36
      %p47 = scmp.eq.s32.totalorder %s27, 0
      %p48 = por %p46, %p47
      %p49 = scmp.ne.s32.totalorder %s35, %s36
      %p50 = scmp.eq.s32.totalorder %s28, 1
      %p51 = por %p49, %p50
      %p53 = scmp.ne.s32.totalorder %s36, %s52
      %p54 = scmp.eq.s32.totalorder %s28, 0
      %p55 = por %p53, %p54
      %s56 = ssub.s32 %s22, %s29
      %p57 = scmp.eq.s32.totalorder %s56, 0
      %s59 = sadd.s32 %s58, 1
      %s60 = scalar_select %p57, %s58, %s59
      %p63 = pneg %p57
      %p64 = scmp.eq.s32.totalorder %s22, 1
      %p65 = por %p63, %p64
      %p66 = scmp.ne.s32.totalorder %s58, %s61
      %p67 = scmp.eq.s32.totalorder %s22, 0
      %p68 = por %p66, %p67
      %p69 = scmp.ne.s32.totalorder %s58, %s61
      %p70 = scmp.eq.s32.totalorder %s27, 1
      %p71 = por %p69, %p70
      %p72 = scmp.ne.s32.totalorder %s61, %s62
      %p73 = scmp.eq.s32.totalorder %s27, 0
      %p74 = por %p72, %p73
      %p75 = scmp.ne.s32.totalorder %s61, %s62
      %p76 = scmp.eq.s32.totalorder %s28, 1
      %p77 = por %p75, %p76
      %p79 = scmp.ne.s32.totalorder %s62, %s78
      %p80 = scmp.eq.s32.totalorder %s28, 0
      %p81 = por %p79, %p80
      %s82 = ssub.s32 %s22, %s29
      %p83 = scmp.eq.s32.totalorder %s82, 0
      %s85 = sadd.s32 %s84, 1
      %s86 = scalar_select %p83, %s84, %s85
      %p89 = pneg %p83
      %p90 = scmp.eq.s32.totalorder %s22, 1
      %p91 = por %p89, %p90
      %p92 = scmp.ne.s32.totalorder %s84, %s87
      %p93 = scmp.eq.s32.totalorder %s22, 0
      %p94 = por %p92, %p93
      %p95 = scmp.ne.s32.totalorder %s84, %s87
      %p96 = scmp.eq.s32.totalorder %s27, 1
      %p97 = por %p95, %p96
      %p98 = scmp.ne.s32.totalorder %s87, %s88
      %p99 = scmp.eq.s32.totalorder %s27, 0
      %p100 = por %p98, %p99
      %p101 = scmp.ne.s32.totalorder %s87, %s88
      %p102 = scmp.eq.s32.totalorder %s28, 1
      %p103 = por %p101, %p102
      %p105 = scmp.ne.s32.totalorder %s88, %s104
      %p106 = scmp.eq.s32.totalorder %s28, 0
      %p107 = por %p105, %p106
      %s108 = ssub.s32 %s22, %s29
      %p109 = scmp.eq.s32.totalorder %s108, 0
      %s111 = sadd.s32 %s110, 1
      %s112 = scalar_select %p109, %s110, %s111
      %p115 = pneg %p109
      %p116 = scmp.eq.s32.totalorder %s22, 1
      %p117 = por %p115, %p116
      %p118 = scmp.ne.s32.totalorder %s110, %s113
      %p119 = scmp.eq.s32.totalorder %s22, 0
      %p120 = por %p118, %p119
      %p121 = scmp.ne.s32.totalorder %s110, %s113
      %p122 = scmp.eq.s32.totalorder %s27, 1
      %p123 = por %p121, %p122
      %p124 = scmp.ne.s32.totalorder %s113, %s114
      %p125 = scmp.eq.s32.totalorder %s27, 0
      %p126 = por %p124, %p125
      %p127 = scmp.ne.s32.totalorder %s113, %s114
      %p128 = scmp.eq.s32.totalorder %s28, 1
      %p129 = por %p127, %p128
      %p131 = scmp.ne.s32.totalorder %s114, %s130
      %p132 = scmp.eq.s32.totalorder %s28, 0
      %p133 = por %p131, %p132
      %s135 = sadd.s32 %s134, 1
      %p138 = scmp.eq.s32.totalorder %s22, 1
      %p139 = scmp.ne.s32.totalorder %s134, %s136
      %p140 = scmp.eq.s32.totalorder %s22, 0
      %p141 = por %p139, %p140
      %p142 = scmp.ne.s32.totalorder %s134, %s136
      %p143 = scmp.eq.s32.totalorder %s27, 1
      %p144 = por %p142, %p143
      %p145 = scmp.ne.s32.totalorder %s136, %s137
      %p146 = scmp.eq.s32.totalorder %s27, 0
      %p147 = por %p145, %p146
      %p148 = scmp.ne.s32.totalorder %s136, %s137
      %p149 = scmp.eq.s32.totalorder %s28, 1
      %p150 = por %p148, %p149
      %p152 = scmp.ne.s32.totalorder %s137, %s151
      %p153 = scmp.eq.s32.totalorder %s28, 0
      %p154 = por %p152, %p153
      %s156 = sadd.s32 %s155, 1
      %p159 = scmp.eq.s32.totalorder %s22, 1
      %p160 = scmp.ne.s32.totalorder %s155, %s157
      %p161 = scmp.eq.s32.totalorder %s22, 0
      %p162 = por %p160, %p161
      %p163 = scmp.ne.s32.totalorder %s155, %s157
      %p164 = scmp.eq.s32.totalorder %s27, 1
      %p165 = por %p163, %p164
      %p166 = scmp.ne.s32.totalorder %s157, %s158
      %p167 = scmp.eq.s32.totalorder %s27, 0
      %p168 = por %p166, %p167
      %p169 = scmp.ne.s32.totalorder %s157, %s158
      %p170 = scmp.eq.s32.totalorder %s28, 1
      %p171 = por %p169, %p170
      %p173 = scmp.ne.s32.totalorder %s158, %s172
      %p174 = scmp.eq.s32.totalorder %s28, 0
      %p175 = por %p173, %p174
      %s177 = sadd.s32 %s176, 1
      %p180 = scmp.eq.s32.totalorder %s22, 1
      %p181 = scmp.ne.s32.totalorder %s176, %s178
      %p182 = scmp.eq.s32.totalorder %s22, 0
      %p183 = por %p181, %p182
      %p184 = scmp.ne.s32.totalorder %s176, %s178
      %p185 = scmp.eq.s32.totalorder %s27, 1
      %p186 = por %p184, %p185
      %p187 = scmp.ne.s32.totalorder %s178, %s179
      %p188 = scmp.eq.s32.totalorder %s27, 0
      %p189 = por %p187, %p188
      %p190 = scmp.ne.s32.totalorder %s178, %s179
      %p191 = scmp.eq.s32.totalorder %s28, 1
      %p192 = por %p190, %p191
      %p194 = scmp.ne.s32.totalorder %s179, %s193
      %p195 = scmp.eq.s32.totalorder %s28, 0
      %p196 = por %p194, %p195
      %s198 = sadd.s32 %s197, 1
      %p201 = scmp.eq.s32.totalorder %s22, 1
      %p202 = scmp.ne.s32.totalorder %s197, %s199
      %p203 = scmp.eq.s32.totalorder %s22, 0
      %p204 = por %p202, %p203
      %p205 = scmp.ne.s32.totalorder %s197, %s199
      %p206 = scmp.eq.s32.totalorder %s27, 1
      %p207 = por %p205, %p206
      %p208 = scmp.ne.s32.totalorder %s199, %s200
      %p209 = scmp.eq.s32.totalorder %s27, 0
      %p210 = por %p208, %p209
      %p211 = scmp.ne.s32.totalorder %s199, %s200
      %p212 = scmp.eq.s32.totalorder %s28, 1
      %p213 = por %p211, %p212
      %p215 = scmp.ne.s32.totalorder %s200, %s214
      %p216 = scmp.eq.s32.totalorder %s28, 0
      %p217 = por %p215, %p216
      %s218 = ssub.s32 %s22, %s29
      %p219 = scmp.eq.s32.totalorder %s218, 0
      %s221 = sadd.s32 %s220, 1
      %s222 = scalar_select %p219, %s220, %s221
      %p225 = pneg %p219
      %p226 = scmp.eq.s32.totalorder %s22, 1
      %p227 = por %p225, %p226
      %p228 = scmp.ne.s32.totalorder %s220, %s223
      %p229 = scmp.eq.s32.totalorder %s22, 0
      %p230 = por %p228, %p229
      %p231 = scmp.ne.s32.totalorder %s220, %s223
      %p232 = scmp.eq.s32.totalorder %s27, 1
      %p233 = por %p231, %p232
      %p234 = scmp.ne.s32.totalorder %s223, %s224
      %p235 = scmp.eq.s32.totalorder %s27, 0
      %p236 = por %p234, %p235
      %p237 = scmp.ne.s32.totalorder %s223, %s224
      %p238 = scmp.eq.s32.totalorder %s28, 1
      %p239 = por %p237, %p238
      %p241 = scmp.ne.s32.totalorder %s224, %s240
      %p242 = scmp.eq.s32.totalorder %s28, 0
      %p243 = por %p241, %p242
      %p244 = scmp.le.s32.totalorder 1, %s22
      %p245 = scmp.lt.s32.totalorder %s22, 3
      %p246 = pnand %p244, %p245
      %p247 = pneg %p246
      // Predicated region
      $region9: #{tpu_custom_call.1} parent=5 // pred_check
        _
      $region10: #{tpu_custom_call.1} parent=5 // pred_check_branch
        %249 = sbr.rel (%p246) target = $region12
      $region11: #{tpu_custom_call.1} parent=5 // pred_region
        %s250 = ssub.s32 %s22, 1
        // Predicated region
        $region13: #{tpu_custom_call.1} parent=11 // pred_check
          %p251 = pneg %p147
        $region14: #{tpu_custom_call.1} parent=11 // pred_check_branch
          %253 = sbr.rel (%p251) target = $region16
        $region15: #{tpu_custom_call.1} parent=11 // pred_region
          %s255 = ssub.s32 64, 64
          %256 = vsyncadd [#allocation7], %s255
          %s258 = sshll.u32 [#allocation6], 4
          %s259 = int_to_ptr.vmem [resolvable:$true] %s258
          %261 = dma.hbm_to_vmem [thread:$0]  %s4, 64, %s259, [#allocation7]
        $region16: #{tpu_custom_call.1} parent=11 // pred_fallthru
          _
        // Predicated region
        $region17: #{tpu_custom_call.1} parent=11 // pred_check
          %p262 = pneg %p168
        $region18: #{tpu_custom_call.1} parent=11 // pred_check_branch
          %264 = sbr.rel (%p262) target = $region20
        $region19: #{tpu_custom_call.1} parent=11 // pred_region
          _
        $region20: #{tpu_custom_call.1} parent=11 // pred_fallthru
          _
        // Predicated region
        $region21: #{tpu_custom_call.1} parent=11 // pred_check
          %p265 = pneg %p189
        $region22: #{tpu_custom_call.1} parent=11 // pred_check_branch
          %267 = sbr.rel (%p265) target = $region24
        $region23: #{tpu_custom_call.1} parent=11 // pred_region
          _
        $region24: #{tpu_custom_call.1} parent=11 // pred_fallthru
          _
        // Predicated region
        $region25: #{tpu_custom_call.1} parent=11 // pred_check
          %p268 = pneg %p210
        $region26: #{tpu_custom_call.1} parent=11 // pred_check_branch
          %270 = sbr.rel (%p268) target = $region28
        $region27: #{tpu_custom_call.1} parent=11 // pred_region
          _
        $region28: #{tpu_custom_call.1} parent=11 // pred_fallthru
          _
      $region12: #{tpu_custom_call.1} parent=5 // pred_fallthru
        _
      %p271 = scmp.lt.s32.totalorder %s22, 2
      // Predicated region
      $region29: #{tpu_custom_call.1} parent=5 // pred_check
        %p272 = pneg %p271
      $region30: #{tpu_custom_call.1} parent=5 // pred_check_branch
        %274 = sbr.rel (%p272) target = $region32
      $region31: #{tpu_custom_call.1} parent=5 // pred_region
        // Predicated region
        $region33: #{tpu_custom_call.1} parent=31 // pred_check
          %p275 = pneg %p42
        $region34: #{tpu_custom_call.1} parent=31 // pred_check_branch
          %277 = sbr.rel (%p275) target = $region36
        $region35: #{tpu_custom_call.1} parent=31 // pred_region
          %s278 = sand.u32 %s32, 1
          %s279 = scalar_lea.sflag [#allocation4], %s278
          %s280 = sand.u32 %s32, 1
          %s281 = smul.addr %s280, 8
          %s282 = scalar_lea.vmem [#allocation3], %s281
          %s284 = ssub.s32 128, 128
          %285 = vsyncadd %s279, %s284
          %s286 = smul.addr %s22, 2
          %s287 = smul.addr %s286, 64
          %s288 = scalar_lea.hbm %s0, %s287
          %s290 = sshll.u32 %s282, 4
          %s291 = int_to_ptr.vmem [resolvable:$true] %s290
          %293 = dma.hbm_to_vmem [thread:$0]  %s288, 128, %s291, %s279
        $region36: #{tpu_custom_call.1} parent=31 // pred_fallthru
          _
        // Predicated region
        $region37: #{tpu_custom_call.1} parent=31 // pred_check
          %p294 = pneg %p68
        $region38: #{tpu_custom_call.1} parent=31 // pred_check_branch
          %296 = sbr.rel (%p294) target = $region40
        $region39: #{tpu_custom_call.1} parent=31 // pred_region
          %p297 = scmp.lt.s32.totalorder %s22, 1
          %s298 = scalar_select %p297, %s22, 1
          %s299 = smul.addr %s298, 2
          %s300 = scalar_lea.vmem %s1, %s299
        $region40: #{tpu_custom_call.1} parent=31 // pred_fallthru
          _
        // Predicated region
        $region41: #{tpu_custom_call.1} parent=31 // pred_check
          %p301 = pneg %p94
        $region42: #{tpu_custom_call.1} parent=31 // pred_check_branch
          %303 = sbr.rel (%p301) target = $region44
        $region43: #{tpu_custom_call.1} parent=31 // pred_region
          %p304 = scmp.lt.s32.totalorder %s22, 1
          %s305 = scalar_select %p304, %s22, 1
          %s306 = smul.addr %s305, 4
          %s307 = scalar_lea.vmem %s2, %s306
        $region44: #{tpu_custom_call.1} parent=31 // pred_fallthru
          _
        // Predicated region
        $region45: #{tpu_custom_call.1} parent=31 // pred_check
          %p308 = pneg %p120
        $region46: #{tpu_custom_call.1} parent=31 // pred_check_branch
          %310 = sbr.rel (%p308) target = $region48
        $region47: #{tpu_custom_call.1} parent=31 // pred_region
          %p311 = scmp.lt.s32.totalorder %s22, 1
          %s312 = scalar_select %p311, %s22, 1
          %s313 = smul.addr %s312, 4
          %s314 = scalar_lea.vmem %s3, %s313
        $region48: #{tpu_custom_call.1} parent=31 // pred_fallthru
          _
      $region32: #{tpu_custom_call.1} parent=5 // pred_fallthru
        _
      %p315 = scmp.le.s32.totalorder 1, %s22
      %p316 = scmp.lt.s32.totalorder %s22, 3
      %p317 = pnand %p315, %p316
      %p318 = pneg %p317
      // Predicated region
      $region49: #{tpu_custom_call.1} parent=5 // pred_check
        _
      $region50: #{tpu_custom_call.1} parent=5 // pred_check_branch
        %320 = sbr.rel (%p317) target = $region52
      $region51: #{tpu_custom_call.1} parent=5 // pred_region
        %s321 = ssub.s32 %s22, 1
        %s322 = sand.u32 %s35, 1
        %s323 = scalar_lea.sflag [#allocation4], %s322
        %s324 = sand.u32 %s35, 1
        %s325 = smul.addr %s324, 8
        %s326 = scalar_lea.vmem [#allocation3], %s325
        // Predicated region
        $region53: #{tpu_custom_call.1} parent=51 // pred_check
          %p327 = pneg %p48
        $region54: #{tpu_custom_call.1} parent=51 // pred_check_branch
          %329 = sbr.rel (%p327) target = $region56
        $region55: #{tpu_custom_call.1} parent=51 // pred_region
          %330 = dma.done %s323, 128
        $region56: #{tpu_custom_call.1} parent=51 // pred_fallthru
          _
        // Predicated region
        $region57: #{tpu_custom_call.1} parent=51 // pred_check
          %p331 = pneg %p147
        $region58: #{tpu_custom_call.1} parent=51 // pred_check_branch
          %333 = sbr.rel (%p331) target = $region60
        $region59: #{tpu_custom_call.1} parent=51 // pred_region
          %334 = dma.done [#allocation7], 64
        $region60: #{tpu_custom_call.1} parent=51 // pred_fallthru
          _
        %s335 = sand.u32 %s35, 1
        %s336 = scalar_lea.sflag [#allocation4], %s335
        %s337 = sand.u32 %s35, 1
        %s338 = smul.addr %s337, 8
        %s339 = scalar_lea.vmem [#allocation3], %s338
        %p340 = pneg %p48
        %p341 = pneg %p45
        %p342 = scmp.lt.s32.totalorder %s27, 1
        %s343 = scalar_select %p342, %s27, 1
        %s344 = smul.addr %s343, 2
        %s345 = scalar_lea.vmem %s1, %s344
        %p346 = pneg %p74
        %p347 = pneg %p71
        %p348 = scmp.lt.s32.totalorder %s27, 1
        %s349 = scalar_select %p348, %s27, 1
        %s350 = smul.addr %s349, 4
        %s351 = scalar_lea.vmem %s2, %s350
        %p352 = pneg %p100
        %p353 = pneg %p97
        %p354 = scmp.lt.s32.totalorder %s27, 1
        %s355 = scalar_select %p354, %s27, 1
        %s356 = smul.addr %s355, 4
        %s357 = scalar_lea.vmem %s3, %s356
        %p358 = pneg %p126
        %p359 = pneg %p123
        %p360 = pneg %p147
        %p361 = pneg %p144
        %p362 = pneg %p168
        %p363 = pneg %p165
        %p364 = pneg %p189
        %p365 = pneg %p186
        %p366 = pneg %p210
        %p367 = pneg %p207
        %p368 = pneg %p236
        %p369 = pneg %p233
        %s370 = sand.u32 %s223, 1
        %s371 = scalar_lea.sflag [#allocation5], %s370
        %s372 = sand.u32 %s223, 1
        %s373 = smul.addr %s372, 8
        %s374 = scalar_lea.vmem [#allocation8], %s373
        %p375 = scmp.lt.s32.totalorder %s27, 1
        %s376 = scalar_select %p375, %s27, 1
        %s377 = smul.addr %s376, 2
        %s378 = scalar_lea.vmem %s1, %s377
        %p379 = scmp.lt.s32.totalorder %s27, 1
        %s380 = scalar_select %p379, %s27, 1
        %s381 = smul.addr %s380, 4
        %s382 = scalar_lea.vmem %s2, %s381
        %p383 = scmp.lt.s32.totalorder %s27, 1
        %s384 = scalar_select %p383, %s27, 1
        %s385 = smul.addr %s384, 4
        %s386 = scalar_lea.vmem %s3, %s385
        %s388 = sld [smem:[#allocation2]]
        %v389 = vld [vmem:[#allocation6] sm:$0xf]
        %v390 = vld [vmem:[%s5] sm:$0xf]
        %v391 = vld [vmem:[%s326] sm:$0xff]
        %v393 = vcombine.high %v391, %v391
        %395 = vrot.lane.b32.xlu0 %v391, 17
        %v396 = vpop.permute.xlu0 %395
        %397 = vrot.lane.b32.xlu0 %v393, 17
        %v398 = vpop.permute.xlu0 %397
        %v399 = vlaneseq
        %v400 = vand.u32 %v399, 127
        %vm401 = vcmp.lt.s32.totalorder %v400, 17
        %v402 = vsel %vm401, %v396, %v398
        %v403 = vsel %vm401, %v398, %v396
        %v404 = vld [vmem:[%s6] ss:$8 sm:$0x3]
        %v406 = vlaneseq
        %v407 = vshrl.u32 %v406, 7
        %v408 = vsub.s32 0, %v407
        %v409 = vrot.slane %v404, %v408
        %v410 = vlaneseq
        %v411 = vshrl.u32 %v410, 7
        %v412 = vsub.s32 1, %v411
        %v413 = vrot.slane %v404, %v412
        %v416 = vmul.f32 %v403, %v409
        %v417 = vmul.f32 %v402, %v413
        %418 = vrot.lane.b32.xlu0 %v391, 16
        %v419 = vpop.permute.xlu0 %418
        %420 = vrot.lane.b32.xlu0 %v393, 16
        %v421 = vpop.permute.xlu0 %420
        %vm422 = vcmp.lt.s32.totalorder %v400, 16
        %v423 = vsel %vm422, %v419, %v421
        %v424 = vsel %vm422, %v421, %v419
        %s425 = scalar_lea.vmem %s6, 1
        %v426 = vld [vmem:[%s425] ss:$8 sm:$0x3]
        %v428 = vlaneseq
        %v429 = vshrl.u32 %v428, 7
        %v430 = vsub.s32 0, %v429
        %v431 = vrot.slane %v426, %v430
        %v432 = vlaneseq
        %v433 = vshrl.u32 %v432, 7
        %v434 = vsub.s32 1, %v433
        %v435 = vrot.slane %v426, %v434
        %v438 = vmul.f32 %v424, %v431
        %v439 = vmul.f32 %v423, %v435
        %440 = vrot.lane.b32.xlu0 %v391, 15
        %v441 = vpop.permute.xlu0 %440
        %442 = vrot.lane.b32.xlu0 %v393, 15
        %v443 = vpop.permute.xlu0 %442
        %vm444 = vcmp.lt.s32.totalorder %v400, 15
        %v445 = vsel %vm444, %v441, %v443
        %v446 = vsel %vm444, %v443, %v441
        %s447 = scalar_lea.vmem %s6, 2
        %v448 = vld [vmem:[%s447] ss:$8 sm:$0x3]
        %v450 = vlaneseq
        %v451 = vshrl.u32 %v450, 7
        %v452 = vsub.s32 0, %v451
        %v453 = vrot.slane %v448, %v452
        %v454 = vlaneseq
        %v455 = vshrl.u32 %v454, 7
        %v456 = vsub.s32 1, %v455
        %v457 = vrot.slane %v448, %v456
        %v460 = vmul.f32 %v446, %v453
        %v461 = vmul.f32 %v445, %v457
        %462 = vrot.lane.b32.xlu0 %v391, 1
        %v463 = vpop.permute.xlu0 %462
        %464 = vrot.lane.b32.xlu0 %v393, 1
        %v465 = vpop.permute.xlu0 %464
        %vm466 = vcmp.lt.s32.totalorder %v400, 1
        %v467 = vsel %vm466, %v463, %v465
        %v468 = vsel %vm466, %v465, %v463
        %s469 = scalar_lea.vmem %s6, 3
        %v470 = vld [vmem:[%s469] ss:$8 sm:$0x3]
        %v472 = vlaneseq
        %v473 = vshrl.u32 %v472, 7
        %v474 = vsub.s32 0, %v473
        %v475 = vrot.slane %v470, %v474
        %v476 = vlaneseq
        %v477 = vshrl.u32 %v476, 7
        %v478 = vsub.s32 1, %v477
        %v479 = vrot.slane %v470, %v478
        %v482 = vmul.f32 %v468, %v475
        %v483 = vmul.f32 %v467, %v479
        %484 = vrot.lane.b32.xlu0 %v391, 127
        %v485 = vpop.permute.xlu0 %484
        %486 = vrot.lane.b32.xlu0 %v393, 127
        %v487 = vpop.permute.xlu0 %486
        %vm488 = vcmp.lt.s32.totalorder %v400, 127
        %v489 = vsel %vm488, %v485, %v487
        %v490 = vsel %vm488, %v487, %v485
        %s491 = scalar_lea.vmem %s6, 5
        %v492 = vld [vmem:[%s491] ss:$8 sm:$0x3]
        %v494 = vlaneseq
        %v495 = vshrl.u32 %v494, 7
        %v496 = vsub.s32 0, %v495
        %v497 = vrot.slane %v492, %v496
        %v498 = vlaneseq
        %v499 = vshrl.u32 %v498, 7
        %v500 = vsub.s32 1, %v499
        %v501 = vrot.slane %v492, %v500
        %v504 = vmul.f32 %v489, %v497
        %v505 = vmul.f32 %v490, %v501
        %506 = vrot.lane.b32.xlu0 %v391, 113
        %v507 = vpop.permute.xlu0 %506
        %508 = vrot.lane.b32.xlu0 %v393, 113
        %v509 = vpop.permute.xlu0 %508
        %vm510 = vcmp.lt.s32.totalorder %v400, 113
        %v511 = vsel %vm510, %v507, %v509
        %v512 = vsel %vm510, %v509, %v507
        %s513 = scalar_lea.vmem %s6, 6
        %v514 = vld [vmem:[%s513] ss:$8 sm:$0x3]
        %v516 = vlaneseq
        %v517 = vshrl.u32 %v516, 7
        %v518 = vsub.s32 0, %v517
        %v519 = vrot.slane %v514, %v518
        %v520 = vlaneseq
        %v521 = vshrl.u32 %v520, 7
        %v522 = vsub.s32 1, %v521
        %v523 = vrot.slane %v514, %v522
        %v526 = vmul.f32 %v511, %v519
        %v527 = vmul.f32 %v512, %v523
        %528 = vrot.lane.b32.xlu0 %v391, 112
        %v529 = vpop.permute.xlu0 %528
        %530 = vrot.lane.b32.xlu0 %v393, 112
        %v531 = vpop.permute.xlu0 %530
        %vm532 = vcmp.lt.s32.totalorder %v400, 112
        %v533 = vsel %vm532, %v529, %v531
        %v534 = vsel %vm532, %v531, %v529
        %s535 = scalar_lea.vmem %s6, 7
        %v536 = vld [vmem:[%s535] ss:$8 sm:$0x3]
        %v538 = vlaneseq
        %v539 = vshrl.u32 %v538, 7
        %v540 = vsub.s32 0, %v539
        %v541 = vrot.slane %v536, %v540
        %v542 = vlaneseq
        %v543 = vshrl.u32 %v542, 7
        %v544 = vsub.s32 1, %v543
        %v545 = vrot.slane %v536, %v544
        %v548 = vmul.f32 %v533, %v541
        %v549 = vmul.f32 %v534, %v545
        %550 = vrot.lane.b32.xlu0 %v391, 111
        %v551 = vpop.permute.xlu0 %550
        %552 = vrot.lane.b32.xlu0 %v393, 111
        %v553 = vpop.permute.xlu0 %552
        %vm554 = vcmp.lt.s32.totalorder %v400, 111
        %v555 = vsel %vm554, %v551, %v553
        %v556 = vsel %vm554, %v553, %v551
        %s557 = scalar_lea.vmem %s6, 16
        %v558 = vld [vmem:[%s557] ss:$8 sm:$0x3]
        %v560 = vlaneseq
        %v561 = vshrl.u32 %v560, 7
        %v562 = vsub.s32 0, %v561
        %v563 = vrot.slane %v558, %v562
        %v564 = vlaneseq
        %v565 = vshrl.u32 %v564, 7
        %v566 = vsub.s32 1, %v565
        %v567 = vrot.slane %v558, %v566
        %v570 = vmul.f32 %v555, %v563
        %v571 = vmul.f32 %v556, %v567
        %v572 = vld [vmem:[%s386] sm:$0xf]
        %v573 = vld [vmem:[%s382] sm:$0xf]
        %575 = vset.pattern.permute.xlu0 0
        %576 = vperm.xlu0 %575, %v572
        %v577 = vpop.permute.xlu0 %576
        %v579 = vmul.f32 %v416, %v577
        %v580 = vmul.f32 %v417, %v577
        %v581 = vpack.c.bf16 %v579, %v579
        %v582 = vpack.c.bf16 %v580, %v580
        %v583 = vmul.f32 %v438, %v577
        %v584 = vmul.f32 %v439, %v577
        %v585 = vpack.c.bf16 %v583, %v583
        %v586 = vpack.c.bf16 %v584, %v584
        %v587 = vmul.f32 %v460, %v577
        %v588 = vmul.f32 %v461, %v577
        %v589 = vpack.c.bf16 %v587, %v587
        %v590 = vpack.c.bf16 %v588, %v588
        %v591 = vmul.f32 %v482, %v577
        %v592 = vmul.f32 %v483, %v577
        %v593 = vpack.c.bf16 %v591, %v591
        %v594 = vpack.c.bf16 %v592, %v592
        %v596 = vunpack.c.l.s4 839922192
        %v597 = vunpack.c.0.s8 %v596
        %v598 = vlaneseq
        %v599 = vshrl.u32 %v598, 7
        %v600 = vsub.s32 %v597, %v599
        %v601 = vrot.slane %v577, %v600
        %v603 = vmul.f32 %v391, %v601
        %v605 = vcombine.high %v603, %v603
        %v607 = vpack.c.bf16 %v603, %v603
        %v608 = vpack.c.bf16 %v605, %v605
        %v609 = vmul.f32 %v504, %v577
        %v610 = vmul.f32 %v505, %v577
        %v611 = vpack.c.bf16 %v609, %v609
        %v612 = vpack.c.bf16 %v610, %v610
        %v613 = vmul.f32 %v526, %v577
        %v614 = vmul.f32 %v527, %v577
        %v615 = vpack.c.bf16 %v613, %v613
        %v616 = vpack.c.bf16 %v614, %v614
        %v617 = vmul.f32 %v548, %v577
        %v618 = vmul.f32 %v549, %v577
        %v619 = vpack.c.bf16 %v617, %v617
        %v620 = vpack.c.bf16 %v618, %v618
        %v621 = vmul.f32 %v570, %v577
        %v622 = vmul.f32 %v571, %v577
        %v623 = vpack.c.bf16 %v621, %v621
        %v624 = vpack.c.bf16 %v622, %v622
        %v627 = vrot.slane %v585, 6
        %v628 = vrot.slane %v586, 6
        %v631 = vrot.slane %v589, 4
        %v632 = vrot.slane %v590, 4
        %v635 = vrot.slane %v593, 2
        %v636 = vrot.slane %v594, 2
        %v639 = vrot.slane %v611, 6
        %v640 = vrot.slane %v612, 6
        %v643 = vrot.slane %v615, 4
        %v644 = vrot.slane %v616, 4
        %v647 = vrot.slane %v619, 2
        %v648 = vrot.slane %v620, 2
        %vm649 = vcmask 1041408
        %v652 = vsel %vm649, %v581, %v627
        %v655 = vsel %vm649, %v582, %v628
        %vm656 = vcmask 1043456
        %v658 = vsel %vm656, %v652, %v631
        %v660 = vsel %vm656, %v655, %v632
        %vm661 = vcmask 1045504
        %v663 = vsel %vm661, %v658, %v635
        %v666 = vsel %vm661, %v660, %v636
        %v670 = vsel %vm649, %v607, %v639
        %v673 = vsel %vm649, %v608, %v640
        %v675 = vsel %vm656, %v670, %v643
        %v677 = vsel %vm656, %v673, %v644
        %v679 = vsel %vm661, %v675, %v647
        %v682 = vsel %vm661, %v677, %v648
        %685 = vset.pattern.permute.xlu0 0
        %686 = vperm.xlu0 %685, %v573
        %v687 = vpop.permute.xlu0 %686
        %v689 = vmul.f32 %v389, %v687
        %v690 = vpack.c.bf16 %v689, %v689
        %v691 = vld [vmem:[%s378] sm:$0x3]
        %v692 = vstv %s388
        %v693 = vmul.f32 %v692, %v691
        %v695 = vlaneseq
        %v696 = vshrl.u32 %v695, 7
        %v697 = vsub.s32 0, %v696
        %v698 = vrot.slane %v693, %v697
        %v699 = vlaneseq
        %v700 = vshrl.u32 %v699, 7
        %v701 = vsub.s32 1, %v700
        %v702 = vrot.slane %v693, %v701
        %vm705 = vcmask 293888
        %v707 = vsel %vm705, %v690, 0
        %v710 = vsel %vm649, %v623, 0
        %v713 = vsel %vm649, %v624, 0
        %715 = vmatprep.subr.bf16.mxu0 0
        %716 = vmatpush1.bf16.msra.mxu0 0
        %717 = vmatprep.subr.bf16.mxu0 0
        %718 = vmatpush1.bf16.msra.mxu0 0
        %719 = vmatprep.subr.bf16.mxu0 0
        %720 = vmatpush1.bf16.msra.mxu0 0
        %721 = vmatprep.subr.bf16.mxu0 0
        %722 = vmatpush1.bf16.msra.mxu0 0
        %723 = vmatprep.subr.bf16.mxu0 0
        %724 = vmatpush1.bf16.msra.mxu0 0
        %725 = vmatprep.subr.bf16.mxu0 %v713
        %726 = vmatpush1.bf16.msra.mxu0 %v710
        %727 = vmatprep.subr.bf16.mxu0 %v682
        %728 = vmatpush1.bf16.msra.mxu0 %v679
        %729 = vmatprep.subr.bf16.mxu0 %v666
        %730 = vmatpush1.bf16.msra.mxu0 %v663
        %731 = vmatprep.subr.bf16.mxu0 0
        %732 = vmatpush2.bf16.msra.mxu0 0
        %733 = vmatprep.subr.bf16.mxu0 0
        %734 = vmatpush2.bf16.msra.mxu0 0
        %735 = vmatprep.subr.bf16.mxu0 0
        %736 = vmatpush2.bf16.msra.mxu0 0
        %737 = vmatprep.subr.bf16.mxu0 0
        %738 = vmatpush2.bf16.msra.mxu0 0
        %739 = vmatprep.subr.bf16.mxu0 0
        %740 = vmatpush2.bf16.msra.mxu0 0
        %741 = vmatprep.subr.bf16.mxu0 0
        %742 = vmatpush2.bf16.msra.mxu0 0
        %743 = vmatprep.subr.bf16.mxu0 0
        %744 = vmatpush2.bf16.msra.mxu0 0
        %745 = vmatprep.subr.bf16.mxu0 0
        %746 = vmatpush2.bf16.msra.mxu0 0
        %747 = vmatprep.mubr.bf16.mxu0 0
        %748 = vmatmul.mubr.bf16.gmra.mxu0 %v707
        %v749 = vpop.f32.mrf.mxu0
        %v750 = vadd.f32 %v698, %v749
        %v751 = vpop.f32.mrf.mxu0
        %v752 = vadd.f32 %v702, %v751
        %v753 = vpop.f32.mrf.mxu0
        %v754 = vpop.f32.mrf.mxu0
        %755 = vdwg.mxu0
        %757 = vset.pattern.permute.xlu0 0
        %758 = vperm.xlu0 %757, %v390
        %v759 = vpop.permute.xlu0 %758
        %v761 = vadd.f32 %v750, %v759
        %v762 = vadd.f32 %v752, %v759
        %vm763 = vcmp.ge.f32.partialorder %v761, 0.0
        %vm764 = vcmp.ge.f32.partialorder %v762, 0.0
        %v765 = vmul.f32 %v761, 0.2
        %v766 = vmul.f32 %v762, 0.2
        %v767 = vsel %vm763, %v761, %v765
        %v768 = vsel %vm764, %v762, %v766
        %v771 = vcombine.low %v767, %v768
        %773 = vst [vmem:[%s374] sm:$0xff] %v771
        %s774 = sand.u32 %s223, 1
        %s775 = scalar_lea.sflag [#allocation5], %s774
        %s776 = sand.u32 %s223, 1
        %s777 = smul.addr %s776, 8
        %s778 = scalar_lea.vmem [#allocation8], %s777
        // Predicated region
        $region61: #{tpu_custom_call.1} parent=51 // pred_check
          %p779 = pneg %p233
        $region62: #{tpu_custom_call.1} parent=51 // pred_check_branch
          %781 = sbr.rel (%p779) target = $region64
        $region63: #{tpu_custom_call.1} parent=51 // pred_region
          %s783 = ssub.s32 128, 128
          %784 = vsyncadd %s775, %s783
          %s785 = smul.addr %s27, 2
          %s786 = smul.addr %s785, 64
          %s787 = scalar_lea.hbm %s8, %s786
          %s789 = sshll.u32 %s778, 4
          %s790 = int_to_ptr.vmem [resolvable:$true] %s789
          %792 = dma.vmem_to_hbm [thread:$0]  %s790, 128, %s787, %s775
        $region64: #{tpu_custom_call.1} parent=51 // pred_fallthru
          _
      $region52: #{tpu_custom_call.1} parent=5 // pred_fallthru
        _
      %p793 = scmp.le.s32.totalorder 2, %s22
      // Predicated region
      $region65: #{tpu_custom_call.1} parent=5 // pred_check
        %p794 = pneg %p793
      $region66: #{tpu_custom_call.1} parent=5 // pred_check_branch
        %796 = sbr.rel (%p794) target = $region68
      $region67: #{tpu_custom_call.1} parent=5 // pred_region
        %s797 = ssub.s32 %s22, 2
        // Predicated region
        $region69: #{tpu_custom_call.1} parent=67 // pred_check
          %p798 = pneg %p239
        $region70: #{tpu_custom_call.1} parent=67 // pred_check_branch
          %800 = sbr.rel (%p798) target = $region72
        $region71: #{tpu_custom_call.1} parent=67 // pred_region
          %s801 = sand.u32 %s224, 1
          %s802 = scalar_lea.sflag [#allocation5], %s801
          %s803 = sand.u32 %s224, 1
          %s804 = smul.addr %s803, 8
          %s805 = scalar_lea.vmem [#allocation8], %s804
          %806 = dma.done %s802, 128
        $region72: #{tpu_custom_call.1} parent=67 // pred_fallthru
          _
      $region68: #{tpu_custom_call.1} parent=5 // pred_fallthru
        _
    $region6: #{tpu_custom_call.1} parent=1 // loop_footer
      %s26 = sadd.s32 1, %s22
    $region7: #{tpu_custom_call.1} parent=1 // loop_footer_branch
      %21 = sbr.rel target = $region3
    $region8: #{tpu_custom_call.1} parent=1 // loop_exit
      _
    %807 = vsyncpa [#allocation4], 1
    %s808 = scalar_lea.sflag [#allocation4], 1
    %809 = vsyncpa %s808, 1
    %810 = vsyncpa [#allocation7], 1
    %811 = vsyncpa [#allocation5], 1
    %s812 = scalar_lea.sflag [#allocation5], 1
    %813 = vsyncpa %s812, 1

</llo_original>
